<compile_context>
chip_gen: v5e
topology: v5e:2x2
jax: 0.10.0
libtpu: 0.0.40
codegen_flags: <defaults>
</compile_context>

<pallas_src>
import jax
import jax.numpy as jnp
import numpy as np
from jax.experimental import pallas as pl
from jax.experimental.pallas import tpu as pltpu


def _const_pow(base, exponent: float):
    """base ** exponent for a trace-time-constant exponent.

    Small non-negative integer exponents use repeated multiplication (pure VPU,
    and matches torch.pow(0, 0) == 1); anything else falls back to jnp.power
    with a scalar exponent.
    """
    e = float(exponent)
    if e == int(e) and 0 <= int(e) <= 16:
        n = int(e)
        if n == 0:
            return jnp.ones_like(base)
        result = None
        acc = base
        while n:
            if n & 1:
                result = acc if result is None else result * acc
            n >>= 1
            if n:
                acc = acc * acc
        return result
    return jnp.power(base, e)


def _make_asym_loss_kernel(gamma_pos, gamma_neg, clip, eps,
                           n_rows, tile_n, need_row_mask):
    def kernel(x_ref, y_ref, out_ref):
        x = x_ref[...].astype(jnp.float32)           # (tile_n, C)
        y = y_ref[...].astype(jnp.float32)           # (tile_n, C), binarized 0/1

        # --- sigmoid probabilities (explicit form; exp + div lower cleanly) ---
        xs_pos = 1.0 / (1.0 + jnp.exp(-x))
        xs_neg = 1.0 - xs_pos
        if clip is not None and clip > 0:
            xs_neg = jnp.minimum(xs_neg + clip, 1.0)

        # TODO(synk): targets are assumed binary {0,1} (as the module docstring
        # states); fractional y would need both log terms instead of a select.
        is_pos = y > 0.5

        # Base CE term: select probability first so only one log per element.
        p_sel = jnp.where(is_pos, xs_pos, xs_neg)
        log_sel = jnp.log(jnp.maximum(p_sel, eps))

        # Asymmetric focusing weight with constant exponents (no tensor-exponent pow).
        if gamma_pos > 0 or gamma_neg > 0:
            w_pos = _const_pow(1.0 - xs_pos, gamma_pos)
            w_neg = _const_pow(1.0 - xs_neg, gamma_neg)
            elem = log_sel * jnp.where(is_pos, w_pos, w_neg)
        else:
            elem = log_sel

        # Mask padded rows of the last (partial) batch tile.
        if need_row_mask:
            i = pl.program_id(0)
            row = i * tile_n + jax.lax.broadcasted_iota(jnp.int32, elem.shape, 0)
            elem = jnp.where(row < n_rows, elem, 0.0)

        # Per-tile partial sum, written lane-dense (value replicated over 128 lanes).
        part = jnp.sum(elem, axis=1, keepdims=True)
        part = jnp.sum(part, axis=0, keepdims=True)                 # (1, 1)
        out_ref[...] = jnp.broadcast_to(part, out_ref.shape)        # (1, 128)

    return kernel


def asymmetric_loss(x, y, *, gamma_neg=4, gamma_pos=1, clip=0.05, eps=1e-8,
                    max_block_rows=None):
    """Pallas-backed AsymmetricLoss forward. x: (N, C) float logits, y: (N, C) binarized."""
    n, c = x.shape
    assert y.shape == (n, c), "targets must match logits shape"

    # Batch-tile size: ~2 MiB of f32 per input block (Pallas double-buffers two
    # inputs -> ~8 MiB of pipeline buffers + a few live temporaries, which fits
    # the default scoped-VMEM budget on v5e/v6e/v7x without raising vmem_limit_bytes).
    bytes_per_row = c * 4
    max_rows = max(8, ((2 << 20) // bytes_per_row) // 8 * 8)
    if max_block_rows is not None:
        max_rows = max(8, (int(max_block_rows) // 8) * 8)
    if n <= max_rows:
        tile_n, grid_n = n, 1            # full-array block is always legal
    else:
        tile_n = max_rows                # multiple of 8
        grid_n = pl.cdiv(n, tile_n)
    need_row_mask = (grid_n * tile_n) > n

    kernel = _make_asym_loss_kernel(
        float(gamma_pos), float(gamma_neg),
        float(clip) if clip is not None else None,
        float(eps), n, tile_n, need_row_mask)

    partials = pl.pallas_call(
        kernel,
        out_shape=jax.ShapeDtypeStruct((1, 128 * grid_n), jnp.float32),
        grid=(grid_n,),
        in_specs=[
            pl.BlockSpec((tile_n, c), lambda i: (i, 0)),
            pl.BlockSpec((tile_n, c), lambda i: (i, 0)),
        ],
        out_specs=pl.BlockSpec((1, 128), lambda i: (0, i)),
        compiler_params=pltpu.CompilerParams(
            dimension_semantics=("parallel",)),   # batch tiles are independent
    )(x, y)

    # Each 128-lane block holds one replicated partial sum; tiny final reduction here.
    per_tile = partials.reshape(grid_n, 128)[:, 0]
    return -jnp.sum(per_tile)


# ------------------------- pure-JAX reference (for verification) -------------------------

def asymmetric_loss_reference(x, y, gamma_neg=4, gamma_pos=1, clip=0.05, eps=1e-8):
    x = x.astype(jnp.float32)
    y = y.astype(jnp.float32)
    xs_pos = 1.0 / (1.0 + jnp.exp(-x))
    xs_neg = 1.0 - xs_pos
    if clip is not None and clip > 0:
        xs_neg = jnp.minimum(xs_neg + clip, 1.0)
    los_pos = y * jnp.log(jnp.maximum(xs_pos, eps))
    los_neg = (1.0 - y) * jnp.log(jnp.maximum(xs_neg, eps))
    loss = los_pos + los_neg
    if gamma_neg > 0 or gamma_pos > 0:
        pt = xs_pos * y + xs_neg * (1.0 - y)
        gamma = gamma_pos * y + gamma_neg * (1.0 - y)
        loss = loss * jnp.power(1.0 - pt, gamma)
    return -jnp.sum(loss)


# ------------------------- demo -------------------------

if __name__ == "__main__":
    key = jax.random.PRNGKey(0)
    kx, ky, kx2, ky2 = jax.random.split(key, 4)

    # Small multi-label problem: batch=16, classes=256 (lane-aligned).
    batch, num_classes = 16, 256
    x = jax.random.normal(kx, (batch, num_classes), dtype=jnp.float32)
    y = jax.random.bernoulli(ky, 0.1, (batch, num_classes)).astype(jnp.float32)

    loss = jax.block_until_ready(asymmetric_loss(x, y))
    ref = asymmetric_loss_reference(x, y)
    assert np.allclose(np.asarray(loss), np.asarray(ref), rtol=1e-4, atol=1e-3), \
        f"mismatch (single tile): pallas={loss} ref={ref}"

    # Exercise the multi-tile + padded-last-tile path (grid=3, 4 masked rows).
    batch2 = 20
    x2 = jax.random.normal(kx2, (batch2, num_classes), dtype=jnp.float32)
    y2 = jax.random.bernoulli(ky2, 0.1, (batch2, num_classes)).astype(jnp.float32)
    loss2 = jax.block_until_ready(asymmetric_loss(x2, y2, max_block_rows=8))
    ref2 = asymmetric_loss_reference(x2, y2)
    assert np.allclose(np.asarray(loss2), np.asarray(ref2), rtol=1e-4, atol=1e-3), \
        f"mismatch (tiled): pallas={loss2} ref={ref2}"

    print("KERNEL_OK")
</pallas_src>

<mosaic_0001>
module attributes {stable_mosaic.version = 11 : i64} {
  func.func @kernel(%arg0: i32, %arg1: memref<16x256xf32, #tpu.memory_space<vmem>>, %arg2: memref<16x256xf32, #tpu.memory_space<vmem>>, %arg3: memref<1x128xf32, #tpu.memory_space<vmem>>) attributes {dimension_semantics = [#tpu.dimension_semantics<parallel>], iteration_bounds = array<i64: 1>, scalar_prefetch = 0 : i64, scratch_operands = 0 : i64, tpu.core_type = #tpu.core_type<tc>, window_params = [{transform_indices = @transform_0, window_bounds = array<i64: 16, 256>}, {transform_indices = @transform_1, window_bounds = array<i64: 16, 256>}, {transform_indices = @transform_2, window_bounds = array<i64: 1, 128>}]} {
    %c0 = arith.constant 0 : index
    %c0_0 = arith.constant 0 : index
    %0 = vector.load %arg1[%c0, %c0_0] : memref<16x256xf32, #tpu.memory_space<vmem>>, vector<16x256xf32>
    %c0_1 = arith.constant 0 : index
    %c0_2 = arith.constant 0 : index
    %1 = vector.load %arg2[%c0_1, %c0_2] : memref<16x256xf32, #tpu.memory_space<vmem>>, vector<16x256xf32>
    %cst = arith.constant 0.000000e+00 : f32
    %2 = vector.broadcast %cst : f32 to vector<16x256xf32>
    %3 = arith.subf %2, %0 : vector<16x256xf32>
    %4 = math.exp %3 : vector<16x256xf32>
    %cst_3 = arith.constant 1.000000e+00 : f32
    %5 = vector.broadcast %cst_3 : f32 to vector<16x256xf32>
    %6 = arith.addf %5, %4 : vector<16x256xf32>
    %cst_4 = arith.constant 1.000000e+00 : f32
    %7 = vector.broadcast %cst_4 : f32 to vector<16x256xf32>
    %8 = arith.divf %7, %6 : vector<16x256xf32>
    %cst_5 = arith.constant 1.000000e+00 : f32
    %9 = vector.broadcast %cst_5 : f32 to vector<16x256xf32>
    %10 = arith.subf %9, %8 : vector<16x256xf32>
    %cst_6 = arith.constant 5.000000e-02 : f32
    %11 = vector.broadcast %cst_6 : f32 to vector<16x256xf32>
    %12 = arith.addf %10, %11 : vector<16x256xf32>
    %cst_7 = arith.constant 1.000000e+00 : f32
    %13 = vector.broadcast %cst_7 : f32 to vector<16x256xf32>
    %14 = arith.minimumf %12, %13 : vector<16x256xf32>
    %cst_8 = arith.constant 5.000000e-01 : f32
    %15 = vector.broadcast %cst_8 : f32 to vector<16x256xf32>
    %16 = arith.cmpf ogt, %1, %15 : vector<16x256xf32>
    %17 = arith.select %16, %8, %14 : vector<16x256xi1>, vector<16x256xf32>
    %cst_9 = arith.constant 9.99999993E-9 : f32
    %18 = vector.broadcast %cst_9 : f32 to vector<16x256xf32>
    %19 = arith.maximumf %17, %18 : vector<16x256xf32>
    %20 = math.log %19 : vector<16x256xf32>
    %cst_10 = arith.constant 1.000000e+00 : f32
    %21 = vector.broadcast %cst_10 : f32 to vector<16x256xf32>
    %22 = arith.subf %21, %8 : vector<16x256xf32>
    %cst_11 = arith.constant 1.000000e+00 : f32
    %23 = vector.broadcast %cst_11 : f32 to vector<16x256xf32>
    %24 = arith.subf %23, %14 : vector<16x256xf32>
    %25 = arith.mulf %24, %24 : vector<16x256xf32>
    %26 = arith.mulf %25, %25 : vector<16x256xf32>
    %27 = arith.select %16, %22, %26 : vector<16x256xi1>, vector<16x256xf32>
    %28 = arith.mulf %20, %27 : vector<16x256xf32>
    %cst_12 = arith.constant dense<0.000000e+00> : vector<16xf32>
    %29 = vector.multi_reduction <add>, %28, %cst_12 [1] : vector<16x256xf32> to vector<16xf32>
    %30 = vector.shape_cast %29 : vector<16xf32> to vector<16x1xf32>
    %cst_13 = arith.constant dense<0.000000e+00> : vector<1xf32>
    %31 = vector.multi_reduction <add>, %30, %cst_13 [0] : vector<16x1xf32> to vector<1xf32>
    %32 = vector.shape_cast %31 : vector<1xf32> to vector<1x1xf32>
    %33 = vector.shape_cast %32 : vector<1x1xf32> to vector<1x1xf32>
    %34 = vector.broadcast %33 : vector<1x1xf32> to vector<1x128xf32>
    %c0_14 = arith.constant 0 : index
    %c0_15 = arith.constant 0 : index
    %35 = vector.load %arg3[%c0_14, %c0_15] : memref<1x128xf32, #tpu.memory_space<vmem>>, vector<1x128xf32>
    tpu.vector_store %arg3[%c0_14, %c0_15], %34 {strides = array<i32>} : memref<1x128xf32, #tpu.memory_space<vmem>>, vector<1x128xf32>,
    return
  }
  func.func @transform_0(%arg0: i32) -> (i32, i32) {
    %c0_i32 = arith.constant 0 : i32
    %c0_i32_0 = arith.constant 0 : i32
    return %arg0, %c0_i32 : i32, i32
  }
  func.func @transform_1(%arg0: i32) -> (i32, i32) {
    %c0_i32 = arith.constant 0 : i32
    %c0_i32_0 = arith.constant 0 : i32
    return %arg0, %c0_i32 : i32, i32
  }
  func.func @transform_2(%arg0: i32) -> (i32, i32) {
    %c0_i32 = arith.constant 0 : i32
    %c0_i32_0 = arith.constant 0 : i32
    return %c0_i32, %arg0 : i32, i32
  }
}

</mosaic_0001>

<llo_original>
// kernel: tpu_custom_call.1
$region0: #{tpu_custom_call.1}
  #allocation0 [shape = 'u32[]', space=smem, size = 0x4, offset = 0x4, fixed_abs, tag = 'smem constant byte address 0x4 - core index']
  #allocation1 [shape = 'u32[72,128]{1,0:T(1,128)}', space=vmem, size = 0x9000, scoped, tag = 'internal scratch']
  %s0 = inlined_call_operand.hbm [shape: f32[16,256], index: 0, kind: input, shape index: {}]
  %s1 = inlined_call_operand.hbm [shape: f32[16,256], index: 1, kind: input, shape index: {}]
  %s2 = inlined_call_operand.hbm [shape: f32[1,128], index: 2, kind: output, shape index: {}]
  %s3 = sld [smem:[#allocation0]]
  $region26: #{tpu_custom_call.1} parent=0
    _
  %s5 = ssub.s32 1, %s3
  %s6 = scalar_select 0, %s5, %s3
  $region1: #{tpu_custom_call.1} parent=0
    #allocation2 [shape = 'u8[16384]{0}', space=vmem, size = 0x4000, scoped, tag = 'input window, operand 0, single buffered']
    #allocation3 [shape = 's32[1]{0}', space=sflag, size = 0x4, scoped, tag = 'scoped memory for tpu_custom_call.1']
    #allocation4 [shape = 's32[1]{0}', space=sflag, size = 0x4, scoped, tag = 'scoped memory for tpu_custom_call.1']
    #allocation5 [shape = 'u8[16384]{0}', space=vmem, size = 0x4000, scoped, tag = 'input window, operand 1, single buffered']
    #allocation6 [shape = 's32[1]{0}', space=sflag, size = 0x4, scoped, tag = 'scoped memory for tpu_custom_call.1']
    #allocation7 [shape = 'u8[512]{0}', space=vmem, size = 0x400, scoped, tag = 'output window, operand 0, single buffered']
    %7 = vsyncpa [#allocation3], 0
    %8 = vsyncpa [#allocation6], 0
    %9 = vsyncpa [#allocation4], 0
    // Predicated region
    $region2: #{tpu_custom_call.1} parent=1 // pred_check
      _
    $region3: #{tpu_custom_call.1} parent=1 // pred_check_branch
      %11 = sbr.rel (0) target = $region5
    $region4: #{tpu_custom_call.1} parent=1 // pred_region
      %13 = vsyncadd [#allocation3], 0
      %s14 = sshll.u32 %s0, 4
      %s15 = int_to_ptr.hbm [resolvable:$true] %s14
      %s16 = sshll.u32 [#allocation2], 4
      %s17 = int_to_ptr.vmem [resolvable:$true] %s16
      %22 = dma.hbm_to_vmem [thread:$0]  %s15, 512, %s17, [#allocation3], 256, 256, 16
    $region5: #{tpu_custom_call.1} parent=1 // pred_fallthru
      _
    // Predicated region
    $region6: #{tpu_custom_call.1} parent=1 // pred_check
      _
    $region7: #{tpu_custom_call.1} parent=1 // pred_check_branch
      %24 = sbr.rel (0) target = $region9
    $region8: #{tpu_custom_call.1} parent=1 // pred_region
      %26 = vsyncadd [#allocation6], 0
      %s27 = sshll.u32 %s1, 4
      %s28 = int_to_ptr.hbm [resolvable:$true] %s27
      %s29 = sshll.u32 [#allocation5], 4
      %s30 = int_to_ptr.vmem [resolvable:$true] %s29
      %35 = dma.hbm_to_vmem [thread:$0]  %s28, 512, %s30, [#allocation6], 256, 256, 16
    $region9: #{tpu_custom_call.1} parent=1 // pred_fallthru
      _
    // Predicated region
    $region10: #{tpu_custom_call.1} parent=1 // pred_check
      _
    $region11: #{tpu_custom_call.1} parent=1 // pred_check_branch
      %37 = sbr.rel (0) target = $region13
    $region12: #{tpu_custom_call.1} parent=1 // pred_region
      %39 = dma.done [#allocation3], 512
    $region13: #{tpu_custom_call.1} parent=1 // pred_fallthru
      _
    // Predicated region
    $region14: #{tpu_custom_call.1} parent=1 // pred_check
      _
    $region15: #{tpu_custom_call.1} parent=1 // pred_check_branch
      %41 = sbr.rel (0) target = $region17
    $region16: #{tpu_custom_call.1} parent=1 // pred_region
      %43 = dma.done [#allocation6], 512
    $region17: #{tpu_custom_call.1} parent=1 // pred_fallthru
      _
    %v44 = vld [vmem:[#allocation2] sm:$0xff]
    %v45 = vld [vmem:[#allocation2 + $0x8] sm:$0xff]
    %v46 = vld [vmem:[#allocation2 + $0x10] sm:$0xff]
    %v47 = vld [vmem:[#allocation2 + $0x18] sm:$0xff]
    %v48 = vld [vmem:[#allocation5] sm:$0xff]
    %v49 = vld [vmem:[#allocation5 + $0x8] sm:$0xff]
    %v50 = vld [vmem:[#allocation5 + $0x10] sm:$0xff]
    %v51 = vld [vmem:[#allocation5 + $0x18] sm:$0xff]
    %v52 = vsub.f32 0.0, %v44
    %v53 = vsub.f32 0.0, %v45
    %v54 = vsub.f32 0.0, %v46
    %v55 = vsub.f32 0.0, %v47
    %v56 = vmul.f32 %v52, 1.442695
    %v57 = vpow.pop %v56
    %v58 = vmul.f32 %v53, 1.442695
    %v59 = vpow.pop %v58
    %v60 = vmul.f32 %v54, 1.442695
    %v61 = vpow.pop %v60
    %v62 = vmul.f32 %v55, 1.442695
    %v63 = vpow.pop %v62
    %v64 = vadd.f32 %v57, 1.0
    %v65 = vadd.f32 %v59, 1.0
    %v66 = vadd.f32 %v61, 1.0
    %v67 = vadd.f32 %v63, 1.0
    %v68 = vrcp.pop %v64
    %v69 = vmul.f32 %v64, %v68
    %v70 = vsub.f32 1.0, %v69
    %v71 = vmul.f32 %v68, %v70
    %v72 = vadd.f32 %v68, %v71
    %vm73 = vweird.f32 %v64
    %vm74 = vweird.f32 %v68
    %vm75 = vmor %vm73, %vm74
    %v76 = vsel %vm75, %v68, %v72
    %v77 = vand.u32 2147483647, %v64
    %vm78 = vcmp.eq.f32.partialorder %v77, 8.507059e+37
    %v79 = vand.u32 %v64, 2147483648
    %v80 = vor.u32 1.1754944e-38, %v79
    %v81 = vsel %vm78, %v80, %v76
    %v82 = vmul.f32 1.0, %v81
    %v83 = vrcp.pop %v65
    %v84 = vmul.f32 %v65, %v83
    %v85 = vsub.f32 1.0, %v84
    %v86 = vmul.f32 %v83, %v85
    %v87 = vadd.f32 %v83, %v86
    %vm88 = vweird.f32 %v65
    %vm89 = vweird.f32 %v83
    %vm90 = vmor %vm88, %vm89
    %v91 = vsel %vm90, %v83, %v87
    %v92 = vand.u32 2147483647, %v65
    %vm93 = vcmp.eq.f32.partialorder %v92, 8.507059e+37
    %v94 = vand.u32 %v65, 2147483648
    %v95 = vor.u32 1.1754944e-38, %v94
    %v96 = vsel %vm93, %v95, %v91
    %v97 = vmul.f32 1.0, %v96
    %v98 = vrcp.pop %v66
    %v99 = vmul.f32 %v66, %v98
    %v100 = vsub.f32 1.0, %v99
    %v101 = vmul.f32 %v98, %v100
    %v102 = vadd.f32 %v98, %v101
    %vm103 = vweird.f32 %v66
    %vm104 = vweird.f32 %v98
    %vm105 = vmor %vm103, %vm104
    %v106 = vsel %vm105, %v98, %v102
    %v107 = vand.u32 2147483647, %v66
    %vm108 = vcmp.eq.f32.partialorder %v107, 8.507059e+37
    %v109 = vand.u32 %v66, 2147483648
    %v110 = vor.u32 1.1754944e-38, %v109
    %v111 = vsel %vm108, %v110, %v106
    %v112 = vmul.f32 1.0, %v111
    %v113 = vrcp.pop %v67
    %v114 = vmul.f32 %v67, %v113
    %v115 = vsub.f32 1.0, %v114
    %v116 = vmul.f32 %v113, %v115
    %v117 = vadd.f32 %v113, %v116
    %vm118 = vweird.f32 %v67
    %vm119 = vweird.f32 %v113
    %vm120 = vmor %vm118, %vm119
    %v121 = vsel %vm120, %v113, %v117
    %v122 = vand.u32 2147483647, %v67
    %vm123 = vcmp.eq.f32.partialorder %v122, 8.507059e+37
    %v124 = vand.u32 %v67, 2147483648
    %v125 = vor.u32 1.1754944e-38, %v124
    %v126 = vsel %vm123, %v125, %v121
    %v127 = vmul.f32 1.0, %v126
    %v128 = vsub.f32 1.0, %v82
    %v129 = vsub.f32 1.0, %v97
    %v130 = vsub.f32 1.0, %v112
    %v131 = vsub.f32 1.0, %v127
    %v132 = vadd.f32 %v128, 0.05
    %v133 = vadd.f32 %v129, 0.05
    %v134 = vadd.f32 %v130, 0.05
    %v135 = vadd.f32 %v131, 0.05
    %v136 = vmin.f32 %v132, 1.0
    %v137 = vmin.f32 %v133, 1.0
    %v138 = vmin.f32 %v134, 1.0
    %v139 = vmin.f32 %v135, 1.0
    %vm140 = vcmp.gt.f32.partialorder %v48, 0.5
    %vm141 = vcmp.gt.f32.partialorder %v49, 0.5
    %vm142 = vcmp.gt.f32.partialorder %v50, 0.5
    %vm143 = vcmp.gt.f32.partialorder %v51, 0.5
    %v144 = vsel %vm140, %v82, %v136
    %v145 = vsel %vm141, %v97, %v137
    %v146 = vsel %vm142, %v112, %v138
    %v147 = vsel %vm143, %v127, %v139
    %v148 = vmax.f32 %v144, 1e-08
    %v149 = vmax.f32 %v145, 1e-08
    %v150 = vmax.f32 %v146, 1e-08
    %v151 = vmax.f32 %v147, 1e-08
    %v152 = vlog2.pop %v148
    %v153 = vmul.f32 %v152, 0.6931472
    %v154 = vlog2.pop %v149
    %v155 = vmul.f32 %v154, 0.6931472
    %v156 = vlog2.pop %v150
    %v157 = vmul.f32 %v156, 0.6931472
    %v158 = vlog2.pop %v151
    %v159 = vmul.f32 %v158, 0.6931472
    %v160 = vsub.f32 1.0, %v136
    %v161 = vsub.f32 1.0, %v137
    %v162 = vsub.f32 1.0, %v138
    %v163 = vsub.f32 1.0, %v139
    %v164 = vmul.f32 %v160, %v160
    %v165 = vmul.f32 %v161, %v161
    %v166 = vmul.f32 %v162, %v162
    %v167 = vmul.f32 %v163, %v163
    %v168 = vmul.f32 %v164, %v164
    %v169 = vmul.f32 %v165, %v165
    %v170 = vmul.f32 %v166, %v166
    %v171 = vmul.f32 %v167, %v167
    %v172 = vsel %vm140, %v128, %v168
    %v173 = vsel %vm141, %v129, %v169
    %v174 = vsel %vm142, %v130, %v170
    %v175 = vsel %vm143, %v131, %v171
    %v176 = vmul.f32 %v153, %v172
    %v177 = vmul.f32 %v155, %v173
    %v178 = vmul.f32 %v157, %v174
    %v179 = vmul.f32 %v159, %v175
    %v180 = vadd.f32 %v176, %v177
    %181 = vadd.xlane.f32.xlu0 %v180
    %v182 = vpop.xlane.xlu0 %181
    %v183 = vadd.f32 %v178, %v179
    %184 = vadd.xlane.f32.xlu0 %v183
    %v185 = vpop.xlane.xlu0 %184
    %v186 = vadd.f32 %v182, %v185
    %v187 = vrot.slane %v186, 4
    %v188 = vadd.f32 %v186, %v187
    %v189 = vrot.slane %v188, 2
    %v190 = vadd.f32 %v188, %v189
    %v191 = vrot.slane %v190, 1
    %v192 = vadd.f32 %v190, %v191
    %193 = vst [vmem:[#allocation7] sm:$0x1] %v192
    // Predicated region
    $region18: #{tpu_custom_call.1} parent=1 // pred_check
      _
    $region19: #{tpu_custom_call.1} parent=1 // pred_check_branch
      %195 = sbr.rel (0) target = $region21
    $region20: #{tpu_custom_call.1} parent=1 // pred_region
      %197 = vsyncadd [#allocation4], 0
      %s199 = sshll.u32 [#allocation7], 4
      %s200 = int_to_ptr.vmem [resolvable:$true] %s199
      %s201 = sshll.u32 %s2, 4
      %s202 = int_to_ptr.hbm [resolvable:$true] %s201
      %204 = dma.vmem_to_hbm [thread:$0]  %s200, 16, %s202, [#allocation4]
    $region21: #{tpu_custom_call.1} parent=1 // pred_fallthru
      _
    // Predicated region
    $region22: #{tpu_custom_call.1} parent=1 // pred_check
      _
    $region23: #{tpu_custom_call.1} parent=1 // pred_check_branch
      %206 = sbr.rel (0) target = $region25
    $region24: #{tpu_custom_call.1} parent=1 // pred_region
      %208 = dma.done [#allocation4], 16
    $region25: #{tpu_custom_call.1} parent=1 // pred_fallthru
      _
    %209 = vsyncpa [#allocation3], 1
    %210 = vsyncpa [#allocation6], 1
    %211 = vsyncpa [#allocation4], 1

</llo_original>
